<compile_context>
chip_gen: v7x
topology: tpu7x:2x2x1
jax: 0.10.0
libtpu: 0.0.40
codegen_flags: <defaults>
</compile_context>

<pallas_src>
import jax
import jax.numpy as jnp
from jax.experimental import pallas as pl
from jax.experimental.pallas import tpu as pltpu  # noqa: F401  (TPU backend)

# ----------------------------- config ---------------------------------------
B = 2                      # batch
IMG = 16                   # image spatial size, NCHW (B, 3, 16, 16)
C_LAT = 4                  # latent channels
LAT = IMG // 2             # latent spatial size (VAE downsamples 2x)
HW = LAT * LAT             # pixels per image in latent space (64)
M = B * HW                 # total pixel columns / lanes (128)
D_TXT = 32                 # text hidden size
SEQ = 8                    # caption length (stand-in for max_length=77)
VOCAB = 100                # stand-in tokenizer vocab
SCALING_FACTOR = 0.18215
NUM_TRAIN_TIMESTEPS = 1000

# per-layer stand-in weight shapes (kept for init_params / packing)
_W_NAMES = ("vae", "txt", "temb", "txtproj", "hint",
            "ctrl_d0", "ctrl_d1", "ctrl_mid",
            "unet_in", "unet_d1", "unet_mid", "unet_up", "unet_out")
_W_DIMS = {
    "vae":      (12, 2 * C_LAT),        # space_to_depth(3->12) -> mean/logvar
    "txt":      (D_TXT, D_TXT),         # text encoder stand-in
    "temb":     (8, C_LAT),             # sinusoidal(8) -> C_LAT
    "txtproj":  (D_TXT, 2 * C_LAT),     # merged ControlNet+UNet text proj
    "hint":     (12, C_LAT),            # ControlNet conditioning embed
    "ctrl_d0":  (C_LAT, 8),
    "ctrl_d1":  (8, 16),
    "ctrl_mid": (16, 16),
    "unet_in":  (C_LAT, 8),
    "unet_d1":  (8, 16),
    "unet_mid": (16, 16),
    "unet_up":  (16, 8),
    "unet_out": (8, C_LAT),
}

# packed-weight slab layout: each fused-GEMM block (stored as W^T) starts on an
# 8-row boundary.  Tuple = (row offset, n_out, k_in).
_BLK_A = (0,   12, 24)   # [vae | hint]            block-diag, per-pixel
_BLK_B = (16,  12, 40)   # [temb | composed text]  block-diag, per-batch
_BLK_C = (32,  16, 8)    # [ctrl_d0 | unet_in]     block-diag
_BLK_D = (48,  32, 16)   # [ctrl_d1 | unet_d1]     block-diag
_BLK_E = (80,  32, 32)   # [ctrl_mid | unet_mid]   block-diag
_BLK_F = (112,  8, 16)   # unet_up
_BLK_G = (120,  4, 8)    # unet_out
W_ROWS, W_COLS = 128, 40

# per-pixel packed operand rows:  img(12) | cond(12) | eps(4) | noise(4) -> 32
# per-batch packed operand rows:  sinemb(8) | pooled text(32) | s0*4 | s1*4 -> 48
PB_ROWS = 48


# ----------------------------- fused Pallas kernel ---------------------------
def _fused_controlnet_kernel(px_ref, pb_ref, w_ref, b_ref, o_ref):
    """Whole forward pass in channels-first (C, M=128) layout (lane-dense)."""

    def silu(y):
        # exp + approx reciprocal both land on the EUP slot; math stays f32.
        return y * pl.reciprocal(1.0 + jnp.exp(-y), approx=True)

    def mm(x, blk):
        off, n_out, k_in = blk
        w = w_ref[off:off + n_out, 0:k_in]           # bf16, pre-cast in glue
        bias = b_ref[off:off + n_out, :]             # f32 (n_out, 1)
        return jnp.dot(w, x.astype(jnp.bfloat16),
                       preferred_element_type=jnp.float32) + bias

    px = px_ref[...]        # (32, M) f32: img | cond | eps | noise
    pb = pb_ref[...]        # (48, B) f32: sinemb | pooled text | s0*4 | s1*4

    # --- per-batch branch: timestep embedding + composed text projections -----
    yb = mm(pb[0:40, :], _BLK_B)                     # (12, B)
    pb_small = jnp.concatenate(
        [silu(yb[0:4, :]),        # t-embedding (SiLU commutes with broadcast)
         yb[4:12, :],             # ctrl_txt | unet_txt
         pb[40:48, :]],           # DDPM scales, already replicated to 4 rows
        axis=0)                                       # (20, B)
    # broadcast each per-batch column to its 64-lane pixel block (exact f32)
    lane = jax.lax.broadcasted_iota(jnp.int32, (20, M), 1)
    pbx = jnp.zeros((20, M), jnp.float32)
    for bi in range(B):
        in_blk = (lane >= bi * HW) & (lane < (bi + 1) * HW)
        pbx = pbx + jnp.where(in_blk, pb_small[:, bi:bi + 1], 0.0)
    temb, ctrl_txt, unet_txt = pbx[0:4, :], pbx[4:8, :], pbx[8:12, :]
    s0, s1 = pbx[12:16, :], pbx[16:20, :]

    # --- fused VAE-moments + ControlNet hint GEMM -----------------------------
    ya = mm(px[0:24, :], _BLK_A)                     # (12, M)
    mean, logvar, hint_pre = ya[0:4, :], ya[4:8, :], ya[8:12, :]
    eps, noise = px[24:28, :], px[28:32, :]
    # VAE.encode(images).latent_dist.sample() * scaling_factor
    latents = (mean + jnp.exp(0.5 * logvar) * eps) * SCALING_FACTOR
    # noise_scheduler.add_noise (DDPM blend, exact f32)
    noisy = s0 * latents + s1 * noise
    hint = silu(hint_pre)

    # --- ControlNet + UNet trunks (paired block-diagonal GEMMs) ---------------
    h = noisy + hint + temb + ctrl_txt               # ControlNet input
    u = noisy + temb + unet_txt                      # UNet input
    yc = silu(mm(jnp.concatenate([h, u], axis=0), _BLK_C))      # (16, M)
    d0 = yc[0:8, :]                                  # ControlNet down res 0
    u0 = yc[8:16, :] + d0
    yd = silu(mm(jnp.concatenate([d0, u0], axis=0), _BLK_D))    # (32, M)
    d1 = yd[0:16, :]                                 # ControlNet down res 1
    u1 = yd[16:32, :] + d1
    ye = mm(jnp.concatenate([d1, u1], axis=0), _BLK_E)          # (32, M)
    mid = ye[0:16, :]                                # ControlNet mid (no act)
    um = silu(ye[16:32, :]) + mid                    # UNet mid + residual
    up = silu(mm(um, _BLK_F))                        # (8, M)
    o_ref[...] = mm(up, _BLK_G).astype(o_ref.dtype)  # (4, M) lane-dense store


# ----------------------------- glue helpers ----------------------------------
def space_to_depth_rows(x, r=2):
    """(B, C, H, W) -> (B*(H/r)*(W/r), r*r*C) row-major pixel rows (done once)."""
    Bn, C, H, W = x.shape
    x = x.reshape(Bn, C, H // r, r, W // r, r)
    x = x.transpose(0, 2, 4, 3, 5, 1)              # (B, H/r, W/r, r, r, C)
    return x.reshape(Bn * (H // r) * (W // r), r * r * C)


def init_params(key):
    def nrm(k, shape, scale=0.05):
        return scale * jax.random.normal(k, shape, dtype=jnp.float32)

    keys = iter(jax.random.split(key, 2 * len(_W_NAMES) + 2))
    p = {"tok_emb": nrm(next(keys), (VOCAB, D_TXT), 0.1)}
    for name in _W_NAMES:
        kin, kout = _W_DIMS[name]
        p[name + "_w"] = nrm(next(keys), (kin, kout))
        p[name + "_b"] = jnp.zeros((kout,), jnp.float32)
    return p


def _block_diag(a, bmat):
    ra, ca = a.shape
    rb, cb = bmat.shape
    out = jnp.zeros((ra + rb, ca + cb), jnp.float32)
    out = out.at[:ra, :ca].set(a)
    out = out.at[ra:, ca:].set(bmat)
    return out


def pack_params(p):
    """Pack every stand-in weight into one bf16 slab + one f32 bias slab."""
    def wT(name):
        return p[name + "_w"].T

    # text branch is purely linear (encode -> mean-pool -> projection), so
    # compose it offline into a single (D_TXT, 2*C_LAT) matrix + bias.
    w_comp = p["txt_w"] @ p["txtproj_w"]
    b_comp = p["txt_b"] @ p["txtproj_w"] + p["txtproj_b"]

    blocks = [
        (_BLK_A, _block_diag(wT("vae"), wT("hint")),
         jnp.concatenate([p["vae_b"], p["hint_b"]])),
        (_BLK_B, _block_diag(wT("temb"), w_comp.T),
         jnp.concatenate([p["temb_b"], b_comp])),
        (_BLK_C, _block_diag(wT("ctrl_d0"), wT("unet_in")),
         jnp.concatenate([p["ctrl_d0_b"], p["unet_in_b"]])),
        (_BLK_D, _block_diag(wT("ctrl_d1"), wT("unet_d1")),
         jnp.concatenate([p["ctrl_d1_b"], p["unet_d1_b"]])),
        (_BLK_E, _block_diag(wT("ctrl_mid"), wT("unet_mid")),
         jnp.concatenate([p["ctrl_mid_b"], p["unet_mid_b"]])),
        (_BLK_F, wT("unet_up"), p["unet_up_b"]),
        (_BLK_G, wT("unet_out"), p["unet_out_b"]),
    ]
    w_slab = jnp.zeros((W_ROWS, W_COLS), jnp.float32)
    b_slab = jnp.zeros((W_ROWS, 1), jnp.float32)
    for (off, n_out, k_in), wblk, bblk in blocks:
        assert wblk.shape == (n_out, k_in)
        w_slab = w_slab.at[off:off + n_out, :k_in].set(wblk)
        b_slab = b_slab.at[off:off + n_out, 0].set(bblk)
    return {"w": w_slab.astype(jnp.bfloat16),    # bf16 weights (half the DMA bytes)
            "b": b_slab,                         # biases stay f32
            "tok_emb": p["tok_emb"]}


# ----------------------------- forward ---------------------------------------
def controlnet_forward(packed, images, captions_ids, conditions, rng):
    assert images.shape[0] == B
    rng_lat, rng_noise, rng_t = jax.random.split(rng, 3)

    # image / condition -> pixel rows (NHWC-flattened space_to_depth), once.
    img2d = space_to_depth_rows(images)                     # (M, 12)
    cond2d = space_to_depth_rows(conditions)                # (M, 12)

    eps2d = jax.random.normal(rng_lat, (M, C_LAT), dtype=jnp.float32)
    # TODO(synk): reference casts noise to float16; kept f32 end-to-end here to
    # avoid the f32->bf16->f32 round trip on TPU.
    noise2d = jax.random.normal(rng_noise, (M, C_LAT), dtype=jnp.float32)
    timesteps = jax.random.randint(rng_t, (B,), 0, NUM_TRAIN_TIMESTEPS)

    # single channels-first per-pixel operand: [img | cond | eps | noise] (32, M)
    data_px = jnp.concatenate([img2d, cond2d, eps2d, noise2d], axis=1).T

    # DDPM schedule scales (linear betas) per batch, replicated to C_LAT rows
    betas = jnp.linspace(1e-4, 0.02, NUM_TRAIN_TIMESTEPS, dtype=jnp.float32)
    acp = jnp.cumprod(1.0 - betas)
    scales = jnp.stack([jnp.sqrt(acp[timesteps]),
                        jnp.sqrt(1.0 - acp[timesteps])], axis=1)     # (B, 2)
    scales_rep = jnp.repeat(scales, C_LAT, axis=1)                   # (B, 8)

    # sinusoidal timestep embedding (B, 8) — not pre-broadcast to pixel rows
    half = 4
    freqs = jnp.exp(-jnp.log(10000.0) * jnp.arange(half, dtype=jnp.float32) / half)
    ang = timesteps.astype(jnp.float32)[:, None] * freqs[None, :]
    sinemb = jnp.concatenate([jnp.sin(ang), jnp.cos(ang)], axis=-1)  # (B, 8)

    # TODO(synk): real CLIP tokenizer/text encoder are external pretrained
    # models; stand-in = token-embedding lookup + mean pool (the linear encoder
    # and both pooled-text projections are composed into the packed weight slab).
    pooled_emb = jnp.take(packed["tok_emb"], captions_ids,
                          axis=0).mean(axis=1)                       # (B, 32)

    # single per-batch operand: [sinemb | pooled text | s0*4 | s1*4] -> (48, B)
    data_pb = jnp.concatenate([sinemb, pooled_emb, scales_rep], axis=1).T

    # single fused kernel, no grid: 4 VMEM-resident operands, one launch,
    # channels-first (C_LAT, 128) output so the store is a full-width vst.
    noise_pred_cf = pl.pallas_call(
        _fused_controlnet_kernel,
        out_shape=jax.ShapeDtypeStruct((C_LAT, M), jnp.float32),
        cost_estimate=pl.CostEstimate(flops=560_000, transcendentals=21_000,
                                      bytes_accessed=30_000),
    )(data_px, data_pb, packed["w"], packed["b"])

    # restore NCHW only at the very end
    noise_pred = noise_pred_cf.reshape(C_LAT, B, LAT, LAT).transpose(1, 0, 2, 3)
    noise = noise2d.reshape(B, LAT, LAT, C_LAT).transpose(0, 3, 1, 2)
    return noise_pred, noise


# ----------------------------- main ------------------------------------------
if __name__ == "__main__":
    key = jax.random.PRNGKey(0)
    k_param, k_img, k_cond, k_cap, k_fwd = jax.random.split(key, 5)

    params = init_params(k_param)
    packed = pack_params(params)              # pack once: 2 weight operands total
    images = jax.random.normal(k_img, (B, 3, IMG, IMG), dtype=jnp.float32)
    conditions = jax.random.normal(k_cond, (B, 3, IMG, IMG), dtype=jnp.float32)
    captions_ids = jax.random.randint(k_cap, (B, SEQ), 0, VOCAB)  # tokenized captions

    fwd = jax.jit(controlnet_forward)
    noise_pred, noise = fwd(packed, images, captions_ids, conditions, k_fwd)
    jax.block_until_ready(noise_pred)
    jax.block_until_ready(noise)

    assert noise_pred.shape == (B, C_LAT, LAT, LAT)
    assert noise.shape == (B, C_LAT, LAT, LAT)
    assert bool(jnp.all(jnp.isfinite(noise_pred)))
    print("KERNEL_OK")
</pallas_src>

<mosaic_0001>
module attributes {stable_mosaic.version = 11 : i64} {
  func.func @_fused_controlnet_kernel(%arg0: memref<32x128xf32, #tpu.memory_space<vmem>>, %arg1: memref<48x2xf32, #tpu.memory_space<vmem>>, %arg2: memref<128x40xbf16, #tpu.memory_space<vmem>>, %arg3: memref<128x1xf32, #tpu.memory_space<vmem>>, %arg4: memref<4x128xf32, #tpu.memory_space<vmem>>) attributes {dimension_semantics = [], scalar_prefetch = 0 : i64, scratch_operands = 0 : i64, tpu.core_type = #tpu.core_type<tc>} {
    %c0 = arith.constant 0 : index
    %c0_0 = arith.constant 0 : index
    %0 = vector.load %arg0[%c0, %c0_0] : memref<32x128xf32, #tpu.memory_space<vmem>>, vector<32x128xf32>
    %c0_1 = arith.constant 0 : index
    %c0_2 = arith.constant 0 : index
    %1 = vector.load %arg1[%c0_1, %c0_2] : memref<48x2xf32, #tpu.memory_space<vmem>>, vector<48x2xf32>
    %2 = vector.extract_strided_slice %1 {offsets = [0, 0], sizes = [40, 2], strides = [1, 1]} : vector<48x2xf32> to vector<40x2xf32>
    %c16 = arith.constant 16 : index
    %c0_3 = arith.constant 0 : index
    %3 = vector.load %arg2[%c16, %c0_3] : memref<128x40xbf16, #tpu.memory_space<vmem>>, vector<12x40xbf16>
    %c16_4 = arith.constant 16 : index
    %c0_5 = arith.constant 0 : index
    %4 = vector.load %arg3[%c16_4, %c0_5] : memref<128x1xf32, #tpu.memory_space<vmem>>, vector<12x1xf32>
    %5 = arith.truncf %2 : vector<40x2xf32> to vector<40x2xbf16>
    %cst = arith.constant dense<0.000000e+00> : vector<12x2xf32>
    %6 = tpu.matmul %3, %5, %cst {dimension_numbers = #tpu.dot_dimension_numbers<[1], [0], [0], [1], [0, 0, 1, 1], [], []>} : vector<12x40xbf16>, vector<40x2xbf16>, vector<12x2xf32> -> vector<12x2xf32>
    %7 = vector.broadcast %4 : vector<12x1xf32> to vector<12x2xf32>
    %8 = arith.addf %6, %7 : vector<12x2xf32>
    %9 = vector.extract_strided_slice %8 {offsets = [0, 0], sizes = [4, 2], strides = [1, 1]} : vector<12x2xf32> to vector<4x2xf32>
    %cst_6 = arith.constant 0.000000e+00 : f32
    %10 = vector.broadcast %cst_6 : f32 to vector<4x2xf32>
    %11 = arith.subf %10, %9 : vector<4x2xf32>
    %12 = math.exp %11 : vector<4x2xf32>
    %cst_7 = arith.constant 1.000000e+00 : f32
    %13 = vector.broadcast %cst_7 : f32 to vector<4x2xf32>
    %14 = arith.addf %13, %12 : vector<4x2xf32>
    %15 = tpu.reciprocal %14 {approx = true} : vector<4x2xf32> -> vector<4x2xf32>
    %16 = arith.mulf %9, %15 : vector<4x2xf32>
    %17 = vector.extract_strided_slice %8 {offsets = [4, 0], sizes = [8, 2], strides = [1, 1]} : vector<12x2xf32> to vector<8x2xf32>
    %18 = vector.extract_strided_slice %1 {offsets = [40, 0], sizes = [8, 2], strides = [1, 1]} : vector<48x2xf32> to vector<8x2xf32>
    %19 = tpu.concatenate %16, %17, %18 in 0 : vector<4x2xf32>, vector<8x2xf32>, vector<8x2xf32> -> vector<20x2xf32>
    %20 = tpu.iota {dimensions = array<i32: 1>} : vector<20x128xi32>
    %cst_8 = arith.constant 0.000000e+00 : f32
    %21 = vector.broadcast %cst_8 : f32 to vector<20x128xf32>
    %c0_i32 = arith.constant 0 : i32
    %22 = vector.broadcast %c0_i32 : i32 to vector<20x128xi32>
    %23 = arith.cmpi sge, %20, %22 : vector<20x128xi32>
    %c64_i32 = arith.constant 64 : i32
    %24 = vector.broadcast %c64_i32 : i32 to vector<20x128xi32>
    %25 = arith.cmpi slt, %20, %24 : vector<20x128xi32>
    %26 = arith.andi %23, %25 : vector<20x128xi1>
    %27 = vector.extract_strided_slice %19 {offsets = [0, 0], sizes = [20, 1], strides = [1, 1]} : vector<20x2xf32> to vector<20x1xf32>
    %cst_9 = arith.constant 0.000000e+00 : f32
    %28 = vector.shape_cast %27 : vector<20x1xf32> to vector<20x1xf32>
    %29 = vector.broadcast %28 : vector<20x1xf32> to vector<20x128xf32>
    %30 = vector.broadcast %cst_9 : f32 to vector<20x128xf32>
    %31 = arith.select %26, %29, %30 : vector<20x128xi1>, vector<20x128xf32>
    %32 = arith.addf %21, %31 : vector<20x128xf32>
    %c64_i32_10 = arith.constant 64 : i32
    %33 = vector.broadcast %c64_i32_10 : i32 to vector<20x128xi32>
    %34 = arith.cmpi sge, %20, %33 : vector<20x128xi32>
    %c128_i32 = arith.constant 128 : i32
    %35 = vector.broadcast %c128_i32 : i32 to vector<20x128xi32>
    %36 = arith.cmpi slt, %20, %35 : vector<20x128xi32>
    %37 = arith.andi %34, %36 : vector<20x128xi1>
    %38 = vector.extract_strided_slice %19 {offsets = [0, 1], sizes = [20, 1], strides = [1, 1]} : vector<20x2xf32> to vector<20x1xf32>
    %cst_11 = arith.constant 0.000000e+00 : f32
    %39 = vector.shape_cast %38 : vector<20x1xf32> to vector<20x1xf32>
    %40 = vector.broadcast %39 : vector<20x1xf32> to vector<20x128xf32>
    %41 = vector.broadcast %cst_11 : f32 to vector<20x128xf32>
    %42 = arith.select %37, %40, %41 : vector<20x128xi1>, vector<20x128xf32>
    %43 = arith.addf %32, %42 : vector<20x128xf32>
    %44 = vector.extract_strided_slice %43 {offsets = [0, 0], sizes = [4, 128], strides = [1, 1]} : vector<20x128xf32> to vector<4x128xf32>
    %45 = vector.extract_strided_slice %43 {offsets = [4, 0], sizes = [4, 128], strides = [1, 1]} : vector<20x128xf32> to vector<4x128xf32>
    %46 = vector.extract_strided_slice %43 {offsets = [8, 0], sizes = [4, 128], strides = [1, 1]} : vector<20x128xf32> to vector<4x128xf32>
    %47 = vector.extract_strided_slice %43 {offsets = [12, 0], sizes = [4, 128], strides = [1, 1]} : vector<20x128xf32> to vector<4x128xf32>
    %48 = vector.extract_strided_slice %43 {offsets = [16, 0], sizes = [4, 128], strides = [1, 1]} : vector<20x128xf32> to vector<4x128xf32>
    %49 = vector.extract_strided_slice %0 {offsets = [0, 0], sizes = [24, 128], strides = [1, 1]} : vector<32x128xf32> to vector<24x128xf32>
    %c0_12 = arith.constant 0 : index
    %c0_13 = arith.constant 0 : index
    %50 = vector.load %arg2[%c0_12, %c0_13] : memref<128x40xbf16, #tpu.memory_space<vmem>>, vector<12x24xbf16>
    %c0_14 = arith.constant 0 : index
    %c0_15 = arith.constant 0 : index
    %51 = vector.load %arg3[%c0_14, %c0_15] : memref<128x1xf32, #tpu.memory_space<vmem>>, vector<12x1xf32>
    %52 = arith.truncf %49 : vector<24x128xf32> to vector<24x128xbf16>
    %cst_16 = arith.constant dense<0.000000e+00> : vector<12x128xf32>
    %53 = tpu.matmul %50, %52, %cst_16 {dimension_numbers = #tpu.dot_dimension_numbers<[1], [0], [0], [1], [0, 0, 1, 1], [], []>} : vector<12x24xbf16>, vector<24x128xbf16>, vector<12x128xf32> -> vector<12x128xf32>
    %54 = vector.broadcast %51 : vector<12x1xf32> to vector<12x128xf32>
    %55 = arith.addf %53, %54 : vector<12x128xf32>
    %56 = vector.extract_strided_slice %55 {offsets = [0, 0], sizes = [4, 128], strides = [1, 1]} : vector<12x128xf32> to vector<4x128xf32>
    %57 = vector.extract_strided_slice %55 {offsets = [4, 0], sizes = [4, 128], strides = [1, 1]} : vector<12x128xf32> to vector<4x128xf32>
    %58 = vector.extract_strided_slice %55 {offsets = [8, 0], sizes = [4, 128], strides = [1, 1]} : vector<12x128xf32> to vector<4x128xf32>
    %59 = vector.extract_strided_slice %0 {offsets = [24, 0], sizes = [4, 128], strides = [1, 1]} : vector<32x128xf32> to vector<4x128xf32>
    %60 = vector.extract_strided_slice %0 {offsets = [28, 0], sizes = [4, 128], strides = [1, 1]} : vector<32x128xf32> to vector<4x128xf32>
    %cst_17 = arith.constant 5.000000e-01 : f32
    %61 = vector.broadcast %cst_17 : f32 to vector<4x128xf32>
    %62 = arith.mulf %61, %57 : vector<4x128xf32>
    %63 = math.exp %62 : vector<4x128xf32>
    %64 = arith.mulf %63, %59 : vector<4x128xf32>
    %65 = arith.addf %56, %64 : vector<4x128xf32>
    %cst_18 = arith.constant 1.821500e-01 : f32
    %66 = vector.broadcast %cst_18 : f32 to vector<4x128xf32>
    %67 = arith.mulf %65, %66 : vector<4x128xf32>
    %68 = arith.mulf %47, %67 : vector<4x128xf32>
    %69 = arith.mulf %48, %60 : vector<4x128xf32>
    %70 = arith.addf %68, %69 : vector<4x128xf32>
    %cst_19 = arith.constant 0.000000e+00 : f32
    %71 = vector.broadcast %cst_19 : f32 to vector<4x128xf32>
    %72 = arith.subf %71, %58 : vector<4x128xf32>
    %73 = math.exp %72 : vector<4x128xf32>
    %cst_20 = arith.constant 1.000000e+00 : f32
    %74 = vector.broadcast %cst_20 : f32 to vector<4x128xf32>
    %75 = arith.addf %74, %73 : vector<4x128xf32>
    %76 = tpu.reciprocal %75 {approx = true} : vector<4x128xf32> -> vector<4x128xf32>
    %77 = arith.mulf %58, %76 : vector<4x128xf32>
    %78 = arith.addf %70, %77 : vector<4x128xf32>
    %79 = arith.addf %78, %44 : vector<4x128xf32>
    %80 = arith.addf %79, %45 : vector<4x128xf32>
    %81 = arith.addf %70, %44 : vector<4x128xf32>
    %82 = arith.addf %81, %46 : vector<4x128xf32>
    %83 = tpu.concatenate %80, %82 in 0 : vector<4x128xf32>, vector<4x128xf32> -> vector<8x128xf32>
    %c32 = arith.constant 32 : index
    %c0_21 = arith.constant 0 : index
    %84 = vector.load %arg2[%c32, %c0_21] : memref<128x40xbf16, #tpu.memory_space<vmem>>, vector<16x8xbf16>
    %c32_22 = arith.constant 32 : index
    %c0_23 = arith.constant 0 : index
    %85 = vector.load %arg3[%c32_22, %c0_23] : memref<128x1xf32, #tpu.memory_space<vmem>>, vector<16x1xf32>
    %86 = arith.truncf %83 : vector<8x128xf32> to vector<8x128xbf16>
    %cst_24 = arith.constant dense<0.000000e+00> : vector<16x128xf32>
    %87 = tpu.matmul %84, %86, %cst_24 {dimension_numbers = #tpu.dot_dimension_numbers<[1], [0], [0], [1], [0, 0, 1, 1], [], []>} : vector<16x8xbf16>, vector<8x128xbf16>, vector<16x128xf32> -> vector<16x128xf32>
    %88 = vector.broadcast %85 : vector<16x1xf32> to vector<16x128xf32>
    %89 = arith.addf %87, %88 : vector<16x128xf32>
    %cst_25 = arith.constant 0.000000e+00 : f32
    %90 = vector.broadcast %cst_25 : f32 to vector<16x128xf32>
    %91 = arith.subf %90, %89 : vector<16x128xf32>
    %92 = math.exp %91 : vector<16x128xf32>
    %cst_26 = arith.constant 1.000000e+00 : f32
    %93 = vector.broadcast %cst_26 : f32 to vector<16x128xf32>
    %94 = arith.addf %93, %92 : vector<16x128xf32>
    %95 = tpu.reciprocal %94 {approx = true} : vector<16x128xf32> -> vector<16x128xf32>
    %96 = arith.mulf %89, %95 : vector<16x128xf32>
    %97 = vector.extract_strided_slice %96 {offsets = [0, 0], sizes = [8, 128], strides = [1, 1]} : vector<16x128xf32> to vector<8x128xf32>
    %98 = vector.extract_strided_slice %96 {offsets = [8, 0], sizes = [8, 128], strides = [1, 1]} : vector<16x128xf32> to vector<8x128xf32>
    %99 = arith.addf %98, %97 : vector<8x128xf32>
    %100 = tpu.concatenate %97, %99 in 0 : vector<8x128xf32>, vector<8x128xf32> -> vector<16x128xf32>
    %c48 = arith.constant 48 : index
    %c0_27 = arith.constant 0 : index
    %101 = vector.load %arg2[%c48, %c0_27] : memref<128x40xbf16, #tpu.memory_space<vmem>>, vector<32x16xbf16>
    %c48_28 = arith.constant 48 : index
    %c0_29 = arith.constant 0 : index
    %102 = vector.load %arg3[%c48_28, %c0_29] : memref<128x1xf32, #tpu.memory_space<vmem>>, vector<32x1xf32>
    %103 = arith.truncf %100 : vector<16x128xf32> to vector<16x128xbf16>
    %cst_30 = arith.constant dense<0.000000e+00> : vector<32x128xf32>
    %104 = tpu.matmul %101, %103, %cst_30 {dimension_numbers = #tpu.dot_dimension_numbers<[1], [0], [0], [1], [0, 0, 1, 1], [], []>} : vector<32x16xbf16>, vector<16x128xbf16>, vector<32x128xf32> -> vector<32x128xf32>
    %105 = vector.broadcast %102 : vector<32x1xf32> to vector<32x128xf32>
    %106 = arith.addf %104, %105 : vector<32x128xf32>
    %cst_31 = arith.constant 0.000000e+00 : f32
    %107 = vector.broadcast %cst_31 : f32 to vector<32x128xf32>
    %108 = arith.subf %107, %106 : vector<32x128xf32>
    %109 = math.exp %108 : vector<32x128xf32>
    %cst_32 = arith.constant 1.000000e+00 : f32
    %110 = vector.broadcast %cst_32 : f32 to vector<32x128xf32>
    %111 = arith.addf %110, %109 : vector<32x128xf32>
    %112 = tpu.reciprocal %111 {approx = true} : vector<32x128xf32> -> vector<32x128xf32>
    %113 = arith.mulf %106, %112 : vector<32x128xf32>
    %114 = vector.extract_strided_slice %113 {offsets = [0, 0], sizes = [16, 128], strides = [1, 1]} : vector<32x128xf32> to vector<16x128xf32>
    %115 = vector.extract_strided_slice %113 {offsets = [16, 0], sizes = [16, 128], strides = [1, 1]} : vector<32x128xf32> to vector<16x128xf32>
    %116 = arith.addf %115, %114 : vector<16x128xf32>
    %117 = tpu.concatenate %114, %116 in 0 : vector<16x128xf32>, vector<16x128xf32> -> vector<32x128xf32>
    %c80 = arith.constant 80 : index
    %c0_33 = arith.constant 0 : index
    %118 = vector.load %arg2[%c80, %c0_33] : memref<128x40xbf16, #tpu.memory_space<vmem>>, vector<32x32xbf16>
    %c80_34 = arith.constant 80 : index
    %c0_35 = arith.constant 0 : index
    %119 = vector.load %arg3[%c80_34, %c0_35] : memref<128x1xf32, #tpu.memory_space<vmem>>, vector<32x1xf32>
    %120 = arith.truncf %117 : vector<32x128xf32> to vector<32x128xbf16>
    %cst_36 = arith.constant dense<0.000000e+00> : vector<32x128xf32>
    %121 = tpu.matmul %118, %120, %cst_36 {dimension_numbers = #tpu.dot_dimension_numbers<[1], [0], [0], [1], [0, 0, 1, 1], [], []>} : vector<32x32xbf16>, vector<32x128xbf16>, vector<32x128xf32> -> vector<32x128xf32>
    %122 = vector.broadcast %119 : vector<32x1xf32> to vector<32x128xf32>
    %123 = arith.addf %121, %122 : vector<32x128xf32>
    %124 = vector.extract_strided_slice %123 {offsets = [0, 0], sizes = [16, 128], strides = [1, 1]} : vector<32x128xf32> to vector<16x128xf32>
    %125 = vector.extract_strided_slice %123 {offsets = [16, 0], sizes = [16, 128], strides = [1, 1]} : vector<32x128xf32> to vector<16x128xf32>
    %cst_37 = arith.constant 0.000000e+00 : f32
    %126 = vector.broadcast %cst_37 : f32 to vector<16x128xf32>
    %127 = arith.subf %126, %125 : vector<16x128xf32>
    %128 = math.exp %127 : vector<16x128xf32>
    %cst_38 = arith.constant 1.000000e+00 : f32
    %129 = vector.broadcast %cst_38 : f32 to vector<16x128xf32>
    %130 = arith.addf %129, %128 : vector<16x128xf32>
    %131 = tpu.reciprocal %130 {approx = true} : vector<16x128xf32> -> vector<16x128xf32>
    %132 = arith.mulf %125, %131 : vector<16x128xf32>
    %133 = arith.addf %132, %124 : vector<16x128xf32>
    %c112 = arith.constant 112 : index
    %c0_39 = arith.constant 0 : index
    %134 = vector.load %arg2[%c112, %c0_39] : memref<128x40xbf16, #tpu.memory_space<vmem>>, vector<8x16xbf16>
    %c112_40 = arith.constant 112 : index
    %c0_41 = arith.constant 0 : index
    %135 = vector.load %arg3[%c112_40, %c0_41] : memref<128x1xf32, #tpu.memory_space<vmem>>, vector<8x1xf32>
    %136 = arith.truncf %133 : vector<16x128xf32> to vector<16x128xbf16>
    %cst_42 = arith.constant dense<0.000000e+00> : vector<8x128xf32>
    %137 = tpu.matmul %134, %136, %cst_42 {dimension_numbers = #tpu.dot_dimension_numbers<[1], [0], [0], [1], [0, 0, 1, 1], [], []>} : vector<8x16xbf16>, vector<16x128xbf16>, vector<8x128xf32> -> vector<8x128xf32>
    %138 = vector.broadcast %135 : vector<8x1xf32> to vector<8x128xf32>
    %139 = arith.addf %137, %138 : vector<8x128xf32>
    %cst_43 = arith.constant 0.000000e+00 : f32
    %140 = vector.broadcast %cst_43 : f32 to vector<8x128xf32>
    %141 = arith.subf %140, %139 : vector<8x128xf32>
    %142 = math.exp %141 : vector<8x128xf32>
    %cst_44 = arith.constant 1.000000e+00 : f32
    %143 = vector.broadcast %cst_44 : f32 to vector<8x128xf32>
    %144 = arith.addf %143, %142 : vector<8x128xf32>
    %145 = tpu.reciprocal %144 {approx = true} : vector<8x128xf32> -> vector<8x128xf32>
    %146 = arith.mulf %139, %145 : vector<8x128xf32>
    %c120 = arith.constant 120 : index
    %c0_45 = arith.constant 0 : index
    %147 = vector.load %arg2[%c120, %c0_45] : memref<128x40xbf16, #tpu.memory_space<vmem>>, vector<4x8xbf16>
    %c120_46 = arith.constant 120 : index
    %c0_47 = arith.constant 0 : index
    %148 = vector.load %arg3[%c120_46, %c0_47] : memref<128x1xf32, #tpu.memory_space<vmem>>, vector<4x1xf32>
    %149 = arith.truncf %146 : vector<8x128xf32> to vector<8x128xbf16>
    %cst_48 = arith.constant dense<0.000000e+00> : vector<4x128xf32>
    %150 = tpu.matmul %147, %149, %cst_48 {dimension_numbers = #tpu.dot_dimension_numbers<[1], [0], [0], [1], [0, 0, 1, 1], [], []>} : vector<4x8xbf16>, vector<8x128xbf16>, vector<4x128xf32> -> vector<4x128xf32>
    %151 = vector.broadcast %148 : vector<4x1xf32> to vector<4x128xf32>
    %152 = arith.addf %150, %151 : vector<4x128xf32>
    %c0_49 = arith.constant 0 : index
    %c0_50 = arith.constant 0 : index
    %153 = vector.load %arg4[%c0_49, %c0_50] : memref<4x128xf32, #tpu.memory_space<vmem>>, vector<4x128xf32>
    tpu.vector_store %arg4[%c0_49, %c0_50], %152 {strides = array<i32>} : memref<4x128xf32, #tpu.memory_space<vmem>>, vector<4x128xf32>,
    return
  }
}

</mosaic_0001>

<llo_original>
// kernel: controlnet_forward.3
$region0: #{controlnet_forward.3}
  #allocation0 [shape = 'u32[]', space=smem, size = 0x4, offset = 0x4, fixed_abs, tag = 'smem constant byte address 0x4 - core index']
  #allocation1 [shape = 'u32[144,128]{1,0:T(1,128)}', space=vmem, size = 0x12000, scoped, tag = 'internal scratch']
  %s0 = inlined_call_operand.vmem [shape: f32[32,128], index: 0, kind: input, shape index: {}]
  %s1 = inlined_call_operand.vmem [shape: f32[48,2], index: 1, kind: input, shape index: {}]
  %s2 = inlined_call_operand.vmem [shape: bf16[128,40], index: 2, kind: input, shape index: {}]
  %s3 = inlined_call_operand.vmem [shape: f32[128,1], index: 3, kind: input, shape index: {}]
  %s4 = inlined_call_operand.vmem [shape: f32[4,128], index: 4, kind: output, shape index: {}]
  %s5 = sld [smem:[#allocation0]]
  $region26: #{controlnet_forward.3} parent=0
    _
  %s7 = ssub.s32 1, %s5
  %s8 = scalar_select 0, %s7, %s5
  // Predicated region
  $region2: #{controlnet_forward.3} parent=0 // pred_check
    _
  $region3: #{controlnet_forward.3} parent=0 // pred_check_branch
    %10 = sbr.rel (0) target = $region5
  $region4: #{controlnet_forward.3} parent=0 // pred_region
    _
  $region5: #{controlnet_forward.3} parent=0 // pred_fallthru
    _
  // Predicated region
  $region6: #{controlnet_forward.3} parent=0 // pred_check
    _
  $region7: #{controlnet_forward.3} parent=0 // pred_check_branch
    %12 = sbr.rel (0) target = $region9
  $region8: #{controlnet_forward.3} parent=0 // pred_region
    _
  $region9: #{controlnet_forward.3} parent=0 // pred_fallthru
    _
  // Predicated region
  $region10: #{controlnet_forward.3} parent=0 // pred_check
    _
  $region11: #{controlnet_forward.3} parent=0 // pred_check_branch
    %14 = sbr.rel (0) target = $region13
  $region12: #{controlnet_forward.3} parent=0 // pred_region
    _
  $region13: #{controlnet_forward.3} parent=0 // pred_fallthru
    _
  // Predicated region
  $region14: #{controlnet_forward.3} parent=0 // pred_check
    _
  $region15: #{controlnet_forward.3} parent=0 // pred_check_branch
    %16 = sbr.rel (0) target = $region17
  $region16: #{controlnet_forward.3} parent=0 // pred_region
    _
  $region17: #{controlnet_forward.3} parent=0 // pred_fallthru
    _
  %v18 = vld [vmem:[%s0] sm:$0xff]
  %v19 = vld [vmem:[%s0 + $0x8] sm:$0xff]
  %v20 = vld [vmem:[%s0 + $0x10] sm:$0xff]
  %v21 = vld [vmem:[%s0 + $0x18] sm:$0xff]
  %v22 = vld [vmem:[%s1] sm:$0xff]
  %v23 = vld [vmem:[%s1 + $0x8] sm:$0xff]
  %v24 = vld [vmem:[%s1 + $0x10] sm:$0xff]
  %v25 = vld [vmem:[%s1 + $0x18] sm:$0xff]
  %v26 = vld [vmem:[%s1 + $0x20] sm:$0xff]
  %v27 = vld [vmem:[%s1 + $0x28] sm:$0xff]
  %v28 = vld [vmem:[%s2 + $0x8] sm:$0xf]
  %v29 = vld [vmem:[%s2 + $0xc] sm:$0x3]
  %v30 = vld [vmem:[%s3 + $0x10] sm:$0xff]
  %v31 = vld [vmem:[%s3 + $0x18] sm:$0xf]
  %v32 = vpack.c.bf16 %v23, %v22
  %v33 = vpack.c.bf16 %v25, %v24
  %v34 = vpack.c.bf16 %v26, %v26
  %36 = vset.pattern.permute.xlu0 0
  %37 = vperm.xlu0 %36, %v30
  %v38 = vpop.permute.xlu0 %37
  %41 = vset.pattern.permute.xlu0 0
  %42 = vperm.xlu0 %41, %v31
  %v43 = vpop.permute.xlu0 %42
  %v47 = vunpack.c.l.b16 %v28
  %v48 = vunpack.c.l.b16 %v29
  %v49 = vpack.c.b16 %v48, %v47
  %vm50 = vcmask 326656
  %v52 = vsel %vm50, %v49, 0
  %vm54 = vcmask 1043456
  %v56 = vsel %vm54, %v34, 0
  %58 = vmatprep.subr.bf16.mxu0 0
  %59 = vmatpush1.bf16.msra.mxu0 %v32
  %60 = vmatprep.subr.bf16.mxu0 0
  %61 = vmatpush1.bf16.msra.mxu0 %v33
  %62 = vmatprep.subr.bf16.mxu0 0
  %63 = vmatpush1.bf16.msra.mxu0 %v56
  %64 = vmatprep.subr.bf16.mxu0 0
  %65 = vmatpush1.bf16.msra.mxu0 0
  %66 = vmatprep.subr.bf16.mxu0 0
  %67 = vmatpush1.bf16.msra.mxu0 0
  %68 = vmatprep.subr.bf16.mxu0 0
  %69 = vmatpush1.bf16.msra.mxu0 0
  %70 = vmatprep.subr.bf16.mxu0 0
  %71 = vmatpush1.bf16.msra.mxu0 0
  %72 = vmatprep.subr.bf16.mxu0 0
  %73 = vmatpush1.bf16.msra.mxu0 0
  %74 = vmatprep.subr.bf16.mxu0 0
  %75 = vmatpush1.bf16.msra.mxu0 0
  %76 = vmatprep.subr.bf16.mxu0 0
  %77 = vmatpush1.bf16.msra.mxu0 0
  %78 = vmatprep.subr.bf16.mxu0 0
  %79 = vmatpush1.bf16.msra.mxu0 0
  %80 = vmatprep.subr.bf16.mxu0 0
  %81 = vmatpush1.bf16.msra.mxu0 0
  %82 = vmatprep.subr.bf16.mxu0 0
  %83 = vmatpush1.bf16.msra.mxu0 0
  %84 = vmatprep.subr.bf16.mxu0 0
  %85 = vmatpush1.bf16.msra.mxu0 0
  %86 = vmatprep.subr.bf16.mxu0 0
  %87 = vmatpush1.bf16.msra.mxu0 0
  %88 = vmatprep.subr.bf16.mxu0 0
  %89 = vmatpush1.bf16.msra.mxu0 0
  %90 = vmatprep.mubr.bf16.mxu0 0
  %91 = vmatmul.mubr.bf16.gmra.mrb[0].mxu0 %v52
  %v92 = vpop.f32.mrb[0].mxu0
  %v93 = vadd.f32 %v38, %v92
  %v94 = vpop.f32.mrb[0].mxu0
  %v95 = vpop.f32.mrb[0].mxu0
  %v96 = vadd.f32 %v43, %v95
  %v97 = vpop.f32.mrb[0].mxu0
  %98 = vdwg.mxu0
  %v99 = vsub.f32 0.0, %v93
  %v100 = vmul.f32 %v99, 1.442695
  %v101 = vpow.pop %v100
  %v102 = vadd.f32 %v101, 1.0
  %v103 = vrcp.pop %v102
  %v104 = vmul.f32 %v93, %v103
  %v106 = vrot.slane %v27, 4
  %v108 = vsel %vm54, %v104, %v93
  %v109 = vsel %vm54, %v96, %v106
  %v110 = vlaneseq
  %v111 = vand.u32 %v110, 127
  %vm112 = vcmp.ge.s32.totalorder %v111, 0
  %vm113 = vcmp.lt.s32.totalorder %v111, 64
  %vm114 = vmand %vm112, %vm113
  %116 = vset.pattern.permute.xlu0 0
  %117 = vperm.xlu0 %116, %v108
  %v118 = vpop.permute.xlu0 %117
  %121 = vset.pattern.permute.xlu0 0
  %122 = vperm.xlu0 %121, %v109
  %v123 = vpop.permute.xlu0 %122
  %125 = vset.pattern.permute.xlu0 0
  %126 = vperm.xlu0 %125, %v106
  %v127 = vpop.permute.xlu0 %126
  %v129 = vsel %vm114, %v118, 0.0
  %v130 = vsel %vm114, %v123, 0.0
  %v131 = vsel %vm114, %v127, 0.0
  %v132 = vadd.f32 %v129, 0.0
  %v133 = vadd.f32 %v130, 0.0
  %v134 = vadd.f32 %v131, 0.0
  %vm135 = vcmp.ge.s32.totalorder %v111, 64
  %vm136 = vcmp.lt.s32.totalorder %v111, 128
  %vm137 = vmand %vm135, %vm136
  %138 = vset.pattern.permute.xlu0 1
  %139 = vperm.xlu0 %138, %v108
  %v140 = vpop.permute.xlu0 %139
  %142 = vset.pattern.permute.xlu0 1
  %143 = vperm.xlu0 %142, %v109
  %v144 = vpop.permute.xlu0 %143
  %146 = vset.pattern.permute.xlu0 1
  %147 = vperm.xlu0 %146, %v106
  %v148 = vpop.permute.xlu0 %147
  %v150 = vsel %vm137, %v140, 0.0
  %v151 = vsel %vm137, %v144, 0.0
  %v152 = vsel %vm137, %v148, 0.0
  %v153 = vadd.f32 %v132, %v150
  %v154 = vadd.f32 %v133, %v151
  %v155 = vadd.f32 %v134, %v152
  %v156 = vld [vmem:[%s2] sm:$0xf]
  %v157 = vld [vmem:[%s2 + $0x4] sm:$0x3]
  %v158 = vld [vmem:[%s3] sm:$0xff]
  %v159 = vld [vmem:[%s3 + $0x8] sm:$0xf]
  %v160 = vpack.c.bf16 %v19, %v18
  %v161 = vpack.c.bf16 %v20, %v20
  %163 = vset.pattern.permute.xlu0 0
  %164 = vperm.xlu0 %163, %v158
  %v165 = vpop.permute.xlu0 %164
  %168 = vset.pattern.permute.xlu0 0
  %169 = vperm.xlu0 %168, %v159
  %v170 = vpop.permute.xlu0 %169
  %v174 = vunpack.c.l.b16 %v156
  %v175 = vunpack.c.l.b16 %v157
  %v176 = vpack.c.b16 %v175, %v174
  %vm177 = vcmask 195584
  %v179 = vsel %vm177, %v176, 0
  %v182 = vsel %vm54, %v161, 0
  %184 = vmatprep.subr.bf16.mxu0 0
  %185 = vmatpush1.bf16.msra.mxu0 %v160
  %186 = vmatprep.subr.bf16.mxu0 0
  %187 = vmatpush1.bf16.msra.mxu0 %v182
  %188 = vmatprep.subr.bf16.mxu0 0
  %189 = vmatpush1.bf16.msra.mxu0 0
  %190 = vmatprep.subr.bf16.mxu0 0
  %191 = vmatpush1.bf16.msra.mxu0 0
  %192 = vmatprep.subr.bf16.mxu0 0
  %193 = vmatpush1.bf16.msra.mxu0 0
  %194 = vmatprep.subr.bf16.mxu0 0
  %195 = vmatpush1.bf16.msra.mxu0 0
  %196 = vmatprep.subr.bf16.mxu0 0
  %197 = vmatpush1.bf16.msra.mxu0 0
  %198 = vmatprep.subr.bf16.mxu0 0
  %199 = vmatpush1.bf16.msra.mxu0 0
  %200 = vmatprep.subr.bf16.mxu0 0
  %201 = vmatpush1.bf16.msra.mxu0 0
  %202 = vmatprep.subr.bf16.mxu0 0
  %203 = vmatpush1.bf16.msra.mxu0 0
  %204 = vmatprep.subr.bf16.mxu0 0
  %205 = vmatpush1.bf16.msra.mxu0 0
  %206 = vmatprep.subr.bf16.mxu0 0
  %207 = vmatpush1.bf16.msra.mxu0 0
  %208 = vmatprep.subr.bf16.mxu0 0
  %209 = vmatpush1.bf16.msra.mxu0 0
  %210 = vmatprep.subr.bf16.mxu0 0
  %211 = vmatpush1.bf16.msra.mxu0 0
  %212 = vmatprep.subr.bf16.mxu0 0
  %213 = vmatpush1.bf16.msra.mxu0 0
  %214 = vmatprep.subr.bf16.mxu0 0
  %215 = vmatpush1.bf16.msra.mxu0 0
  %216 = vmatprep.mubr.bf16.mxu0 0
  %217 = vmatmul.mubr.bf16.gmra.mrb[0].mxu0 %v179
  %v218 = vpop.f32.mrb[0].mxu0
  %v219 = vadd.f32 %v165, %v218
  %v220 = vpop.f32.mrb[0].mxu0
  %v221 = vpop.f32.mrb[0].mxu0
  %v222 = vadd.f32 %v170, %v221
  %v223 = vpop.f32.mrb[0].mxu0
  %224 = vdwg.mxu0
  %v225 = vmul.f32 %v219, 0.5
  %v226 = vmul.f32 %v225, 1.442695
  %v227 = vpow.pop %v226
  %v229 = vrot.slane %v21, 4
  %v231 = vmul.f32 %v227, %v229
  %v233 = vrot.slane %v231, 4
  %v235 = vadd.f32 %v219, %v233
  %v236 = vmul.f32 %v235, 0.18215
  %v238 = vrot.slane %v236, 4
  %v240 = vmul.f32 %v154, %v238
  %v241 = vmul.f32 %v155, %v229
  %v243 = vrot.slane %v241, 4
  %v245 = vadd.f32 %v240, %v243
  %v246 = vsub.f32 0.0, %v222
  %v247 = vmul.f32 %v246, 1.442695
  %v248 = vpow.pop %v247
  %v249 = vadd.f32 %v248, 1.0
  %v250 = vrcp.pop %v249
  %v251 = vmul.f32 %v222, %v250
  %v253 = vrot.slane %v251, 4
  %v255 = vadd.f32 %v245, %v253
  %v257 = vrot.slane %v153, 4
  %v259 = vadd.f32 %v255, %v257
  %v260 = vadd.f32 %v259, %v153
  %v261 = vadd.f32 %v245, %v257
  %v263 = vrot.slane %v154, 4
  %v265 = vadd.f32 %v261, %v263
  %v267 = vrot.slane %v260, 4
  %v269 = vsel %vm54, %v267, %v265
  %v270 = vld [vmem:[%s2 + $0x10] sm:$0xf]
  %v271 = vld [vmem:[%s2 + $0x14] sm:$0xf]
  %v272 = vld [vmem:[%s3 + $0x20] sm:$0xff]
  %v273 = vld [vmem:[%s3 + $0x28] sm:$0xff]
  %v274 = vpack.c.bf16 %v269, %v269
  %276 = vset.pattern.permute.xlu0 0
  %277 = vperm.xlu0 %276, %v272
  %v278 = vpop.permute.xlu0 %277
  %281 = vset.pattern.permute.xlu0 0
  %282 = vperm.xlu0 %281, %v273
  %v283 = vpop.permute.xlu0 %282
  %v287 = vunpack.c.l.b16 %v270
  %v288 = vunpack.c.l.b16 %v271
  %v289 = vpack.c.b16 %v288, %v287
  %vm290 = vcmask 64512
  %v292 = vsel %vm290, %v289, 0
  %v295 = vsel %vm54, %v274, 0
  %297 = vmatprep.subr.bf16.mxu0 0
  %298 = vmatpush1.bf16.msra.mxu0 %v295
  %299 = vmatprep.subr.bf16.mxu0 0
  %300 = vmatpush1.bf16.msra.mxu0 0
  %301 = vmatprep.subr.bf16.mxu0 0
  %302 = vmatpush1.bf16.msra.mxu0 0
  %303 = vmatprep.subr.bf16.mxu0 0
  %304 = vmatpush1.bf16.msra.mxu0 0
  %305 = vmatprep.subr.bf16.mxu0 0
  %306 = vmatpush1.bf16.msra.mxu0 0
  %307 = vmatprep.subr.bf16.mxu0 0
  %308 = vmatpush1.bf16.msra.mxu0 0
  %309 = vmatprep.subr.bf16.mxu0 0
  %310 = vmatpush1.bf16.msra.mxu0 0
  %311 = vmatprep.subr.bf16.mxu0 0
  %312 = vmatpush1.bf16.msra.mxu0 0
  %313 = vmatprep.subr.bf16.mxu0 0
  %314 = vmatpush1.bf16.msra.mxu0 0
  %315 = vmatprep.subr.bf16.mxu0 0
  %316 = vmatpush1.bf16.msra.mxu0 0
  %317 = vmatprep.subr.bf16.mxu0 0
  %318 = vmatpush1.bf16.msra.mxu0 0
  %319 = vmatprep.subr.bf16.mxu0 0
  %320 = vmatpush1.bf16.msra.mxu0 0
  %321 = vmatprep.subr.bf16.mxu0 0
  %322 = vmatpush1.bf16.msra.mxu0 0
  %323 = vmatprep.subr.bf16.mxu0 0
  %324 = vmatpush1.bf16.msra.mxu0 0
  %325 = vmatprep.subr.bf16.mxu0 0
  %326 = vmatpush1.bf16.msra.mxu0 0
  %327 = vmatprep.subr.bf16.mxu0 0
  %328 = vmatpush1.bf16.msra.mxu0 0
  %329 = vmatprep.mubr.bf16.mxu0 0
  %330 = vmatmul.mubr.bf16.gmra.mrb[0].mxu0 %v292
  %v331 = vpop.f32.mrb[0].mxu0
  %v332 = vadd.f32 %v278, %v331
  %v333 = vpop.f32.mrb[0].mxu0
  %v334 = vpop.f32.mrb[0].mxu0
  %v335 = vadd.f32 %v283, %v334
  %v336 = vpop.f32.mrb[0].mxu0
  %337 = vdwg.mxu0
  %v338 = vsub.f32 0.0, %v332
  %v339 = vsub.f32 0.0, %v335
  %v340 = vmul.f32 %v338, 1.442695
  %v341 = vpow.pop %v340
  %v342 = vmul.f32 %v339, 1.442695
  %v343 = vpow.pop %v342
  %v344 = vadd.f32 %v341, 1.0
  %v345 = vadd.f32 %v343, 1.0
  %v346 = vrcp.pop %v344
  %v347 = vrcp.pop %v345
  %v348 = vmul.f32 %v332, %v346
  %v349 = vmul.f32 %v335, %v347
  %v350 = vadd.f32 %v349, %v348
  %v351 = vld [vmem:[%s2 + $0x18] sm:$0xf]
  %v352 = vld [vmem:[%s2 + $0x1c] sm:$0xf]
  %v353 = vld [vmem:[%s2 + $0x20] sm:$0xf]
  %v354 = vld [vmem:[%s2 + $0x24] sm:$0xf]
  %v355 = vld [vmem:[%s3 + $0x30] sm:$0xff]
  %v356 = vld [vmem:[%s3 + $0x38] sm:$0xff]
  %v357 = vld [vmem:[%s3 + $0x40] sm:$0xff]
  %v358 = vld [vmem:[%s3 + $0x48] sm:$0xff]
  %v359 = vpack.c.bf16 %v350, %v348
  %361 = vset.pattern.permute.xlu0 0
  %362 = vperm.xlu0 %361, %v355
  %v363 = vpop.permute.xlu0 %362
  %366 = vset.pattern.permute.xlu0 0
  %367 = vperm.xlu0 %366, %v356
  %v368 = vpop.permute.xlu0 %367
  %371 = vset.pattern.permute.xlu0 0
  %372 = vperm.xlu0 %371, %v357
  %v373 = vpop.permute.xlu0 %372
  %376 = vset.pattern.permute.xlu0 0
  %377 = vperm.xlu0 %376, %v358
  %v378 = vpop.permute.xlu0 %377
  %v384 = vunpack.c.l.b16 %v351
  %v385 = vunpack.c.l.b16 %v352
  %v386 = vunpack.c.l.b16 %v353
  %v387 = vunpack.c.l.b16 %v354
  %v388 = vpack.c.b16 %v385, %v384
  %v389 = vpack.c.b16 %v387, %v386
  %vm390 = vcmask 130048
  %v392 = vsel %vm390, %v388, 0
  %v395 = vsel %vm390, %v389, 0
  %397 = vmatprep.subr.bf16.mxu0 0
  %398 = vmatpush1.bf16.msra.mxu0 %v359
  %399 = vmatprep.subr.bf16.mxu0 0
  %400 = vmatpush1.bf16.msra.mxu0 0
  %401 = vmatprep.subr.bf16.mxu0 0
  %402 = vmatpush1.bf16.msra.mxu0 0
  %403 = vmatprep.subr.bf16.mxu0 0
  %404 = vmatpush1.bf16.msra.mxu0 0
  %405 = vmatprep.subr.bf16.mxu0 0
  %406 = vmatpush1.bf16.msra.mxu0 0
  %407 = vmatprep.subr.bf16.mxu0 0
  %408 = vmatpush1.bf16.msra.mxu0 0
  %409 = vmatprep.subr.bf16.mxu0 0
  %410 = vmatpush1.bf16.msra.mxu0 0
  %411 = vmatprep.subr.bf16.mxu0 0
  %412 = vmatpush1.bf16.msra.mxu0 0
  %413 = vmatprep.subr.bf16.mxu0 0
  %414 = vmatpush1.bf16.msra.mxu0 0
  %415 = vmatprep.subr.bf16.mxu0 0
  %416 = vmatpush1.bf16.msra.mxu0 0
  %417 = vmatprep.subr.bf16.mxu0 0
  %418 = vmatpush1.bf16.msra.mxu0 0
  %419 = vmatprep.subr.bf16.mxu0 0
  %420 = vmatpush1.bf16.msra.mxu0 0
  %421 = vmatprep.subr.bf16.mxu0 0
  %422 = vmatpush1.bf16.msra.mxu0 0
  %423 = vmatprep.subr.bf16.mxu0 0
  %424 = vmatpush1.bf16.msra.mxu0 0
  %425 = vmatprep.subr.bf16.mxu0 0
  %426 = vmatpush1.bf16.msra.mxu0 0
  %427 = vmatprep.subr.bf16.mxu0 0
  %428 = vmatpush1.bf16.msra.mxu0 0
  %429 = vmatprep.mubr.bf16.mxu0 0
  %430 = vmatmul.mubr.bf16.gmra.mrb[0].mxu0 %v392
  %v431 = vpop.f32.mrb[0].mxu0
  %v432 = vadd.f32 %v363, %v431
  %v433 = vpop.f32.mrb[0].mxu0
  %v434 = vpop.f32.mrb[0].mxu0
  %v435 = vadd.f32 %v368, %v434
  %v436 = vpop.f32.mrb[0].mxu0
  %437 = vmatprep.mubr.bf16.mxu0 0
  %438 = vmatmul.mubr.bf16.gmra.mrb[0].mxu0 %v395
  %v439 = vpop.f32.mrb[0].mxu0
  %v440 = vadd.f32 %v373, %v439
  %v441 = vpop.f32.mrb[0].mxu0
  %v442 = vpop.f32.mrb[0].mxu0
  %v443 = vadd.f32 %v378, %v442
  %v444 = vpop.f32.mrb[0].mxu0
  %445 = vdwg.mxu0
  %v446 = vsub.f32 0.0, %v432
  %v447 = vsub.f32 0.0, %v435
  %v448 = vsub.f32 0.0, %v440
  %v449 = vsub.f32 0.0, %v443
  %v450 = vmul.f32 %v446, 1.442695
  %v451 = vpow.pop %v450
  %v452 = vmul.f32 %v447, 1.442695
  %v453 = vpow.pop %v452
  %v454 = vmul.f32 %v448, 1.442695
  %v455 = vpow.pop %v454
  %v456 = vmul.f32 %v449, 1.442695
  %v457 = vpow.pop %v456
  %v458 = vadd.f32 %v451, 1.0
  %v459 = vadd.f32 %v453, 1.0
  %v460 = vadd.f32 %v455, 1.0
  %v461 = vadd.f32 %v457, 1.0
  %v462 = vrcp.pop %v458
  %v463 = vrcp.pop %v459
  %v464 = vrcp.pop %v460
  %v465 = vrcp.pop %v461
  %v466 = vmul.f32 %v432, %v462
  %v467 = vmul.f32 %v435, %v463
  %v468 = vmul.f32 %v440, %v464
  %v469 = vmul.f32 %v443, %v465
  %v470 = vadd.f32 %v468, %v466
  %v471 = vadd.f32 %v469, %v467
  %v472 = vld [vmem:[%s2 + $0x28] sm:$0xf]
  %v473 = vld [vmem:[%s2 + $0x2c] sm:$0xf]
  %v474 = vld [vmem:[%s2 + $0x30] sm:$0xf]
  %v475 = vld [vmem:[%s2 + $0x34] sm:$0xf]
  %v476 = vld [vmem:[%s3 + $0x50] sm:$0xff]
  %v477 = vld [vmem:[%s3 + $0x58] sm:$0xff]
  %v478 = vld [vmem:[%s3 + $0x60] sm:$0xff]
  %v479 = vld [vmem:[%s3 + $0x68] sm:$0xff]
  %v480 = vpack.c.bf16 %v467, %v466
  %v481 = vpack.c.bf16 %v471, %v470
  %483 = vset.pattern.permute.xlu0 0
  %484 = vperm.xlu0 %483, %v476
  %v485 = vpop.permute.xlu0 %484
  %488 = vset.pattern.permute.xlu0 0
  %489 = vperm.xlu0 %488, %v477
  %v490 = vpop.permute.xlu0 %489
  %493 = vset.pattern.permute.xlu0 0
  %494 = vperm.xlu0 %493, %v478
  %v495 = vpop.permute.xlu0 %494
  %498 = vset.pattern.permute.xlu0 0
  %499 = vperm.xlu0 %498, %v479
  %v500 = vpop.permute.xlu0 %499
  %v506 = vunpack.c.l.b16 %v472
  %v507 = vunpack.c.l.b16 %v473
  %v508 = vunpack.c.l.b16 %v474
  %v509 = vunpack.c.l.b16 %v475
  %v510 = vpack.c.b16 %v507, %v506
  %v511 = vpack.c.b16 %v509, %v508
  %vm512 = vcmask 261120
  %v514 = vsel %vm512, %v510, 0
  %v517 = vsel %vm512, %v511, 0
  %519 = vmatprep.subr.bf16.mxu0 0
  %520 = vmatpush1.bf16.msra.mxu0 %v480
  %521 = vmatprep.subr.bf16.mxu0 0
  %522 = vmatpush1.bf16.msra.mxu0 %v481
  %523 = vmatprep.subr.bf16.mxu0 0
  %524 = vmatpush1.bf16.msra.mxu0 0
  %525 = vmatprep.subr.bf16.mxu0 0
  %526 = vmatpush1.bf16.msra.mxu0 0
  %527 = vmatprep.subr.bf16.mxu0 0
  %528 = vmatpush1.bf16.msra.mxu0 0
  %529 = vmatprep.subr.bf16.mxu0 0
  %530 = vmatpush1.bf16.msra.mxu0 0
  %531 = vmatprep.subr.bf16.mxu0 0
  %532 = vmatpush1.bf16.msra.mxu0 0
  %533 = vmatprep.subr.bf16.mxu0 0
  %534 = vmatpush1.bf16.msra.mxu0 0
  %535 = vmatprep.subr.bf16.mxu0 0
  %536 = vmatpush1.bf16.msra.mxu0 0
  %537 = vmatprep.subr.bf16.mxu0 0
  %538 = vmatpush1.bf16.msra.mxu0 0
  %539 = vmatprep.subr.bf16.mxu0 0
  %540 = vmatpush1.bf16.msra.mxu0 0
  %541 = vmatprep.subr.bf16.mxu0 0
  %542 = vmatpush1.bf16.msra.mxu0 0
  %543 = vmatprep.subr.bf16.mxu0 0
  %544 = vmatpush1.bf16.msra.mxu0 0
  %545 = vmatprep.subr.bf16.mxu0 0
  %546 = vmatpush1.bf16.msra.mxu0 0
  %547 = vmatprep.subr.bf16.mxu0 0
  %548 = vmatpush1.bf16.msra.mxu0 0
  %549 = vmatprep.subr.bf16.mxu0 0
  %550 = vmatpush1.bf16.msra.mxu0 0
  %551 = vmatprep.mubr.bf16.mxu0 0
  %552 = vmatmul.mubr.bf16.gmra.mrb[0].mxu0 %v514
  %v553 = vpop.f32.mrb[0].mxu0
  %v554 = vadd.f32 %v485, %v553
  %v555 = vpop.f32.mrb[0].mxu0
  %v556 = vpop.f32.mrb[0].mxu0
  %v557 = vadd.f32 %v490, %v556
  %v558 = vpop.f32.mrb[0].mxu0
  %559 = vmatprep.mubr.bf16.mxu0 0
  %560 = vmatmul.mubr.bf16.gmra.mrb[0].mxu0 %v517
  %v561 = vpop.f32.mrb[0].mxu0
  %v562 = vadd.f32 %v495, %v561
  %v563 = vpop.f32.mrb[0].mxu0
  %v564 = vpop.f32.mrb[0].mxu0
  %v565 = vadd.f32 %v500, %v564
  %v566 = vpop.f32.mrb[0].mxu0
  %567 = vdwg.mxu0
  %v568 = vsub.f32 0.0, %v562
  %v569 = vsub.f32 0.0, %v565
  %v570 = vmul.f32 %v568, 1.442695
  %v571 = vpow.pop %v570
  %v572 = vmul.f32 %v569, 1.442695
  %v573 = vpow.pop %v572
  %v574 = vadd.f32 %v571, 1.0
  %v575 = vadd.f32 %v573, 1.0
  %v576 = vrcp.pop %v574
  %v577 = vrcp.pop %v575
  %v578 = vmul.f32 %v562, %v576
  %v579 = vmul.f32 %v565, %v577
  %v580 = vadd.f32 %v578, %v554
  %v581 = vadd.f32 %v579, %v557
  %v582 = vld [vmem:[%s2 + $0x38] sm:$0xf]
  %v583 = vld [vmem:[%s3 + $0x70] sm:$0xff]
  %v584 = vpack.c.bf16 %v581, %v580
  %586 = vset.pattern.permute.xlu0 0
  %587 = vperm.xlu0 %586, %v583
  %v588 = vpop.permute.xlu0 %587
  %v591 = vsel %vm390, %v582, 0
  %593 = vmatprep.subr.bf16.mxu0 0
  %594 = vmatpush1.bf16.msra.mxu0 %v584
  %595 = vmatprep.subr.bf16.mxu0 0
  %596 = vmatpush1.bf16.msra.mxu0 0
  %597 = vmatprep.subr.bf16.mxu0 0
  %598 = vmatpush1.bf16.msra.mxu0 0
  %599 = vmatprep.subr.bf16.mxu0 0
  %600 = vmatpush1.bf16.msra.mxu0 0
  %601 = vmatprep.subr.bf16.mxu0 0
  %602 = vmatpush1.bf16.msra.mxu0 0
  %603 = vmatprep.subr.bf16.mxu0 0
  %604 = vmatpush1.bf16.msra.mxu0 0
  %605 = vmatprep.subr.bf16.mxu0 0
  %606 = vmatpush1.bf16.msra.mxu0 0
  %607 = vmatprep.subr.bf16.mxu0 0
  %608 = vmatpush1.bf16.msra.mxu0 0
  %609 = vmatprep.subr.bf16.mxu0 0
  %610 = vmatpush1.bf16.msra.mxu0 0
  %611 = vmatprep.subr.bf16.mxu0 0
  %612 = vmatpush1.bf16.msra.mxu0 0
  %613 = vmatprep.subr.bf16.mxu0 0
  %614 = vmatpush1.bf16.msra.mxu0 0
  %615 = vmatprep.subr.bf16.mxu0 0
  %616 = vmatpush1.bf16.msra.mxu0 0
  %617 = vmatprep.subr.bf16.mxu0 0
  %618 = vmatpush1.bf16.msra.mxu0 0
  %619 = vmatprep.subr.bf16.mxu0 0
  %620 = vmatpush1.bf16.msra.mxu0 0
  %621 = vmatprep.subr.bf16.mxu0 0
  %622 = vmatpush1.bf16.msra.mxu0 0
  %623 = vmatprep.subr.bf16.mxu0 0
  %624 = vmatpush1.bf16.msra.mxu0 0
  %625 = vmatprep.mubr.bf16.mxu0 0
  %626 = vmatmul.mubr.bf16.gmra.mrb[0].mxu0 %v591
  %v627 = vpop.f32.mrb[0].mxu0
  %v628 = vadd.f32 %v588, %v627
  %v629 = vpop.f32.mrb[0].mxu0
  %v630 = vpop.f32.mrb[0].mxu0
  %v631 = vpop.f32.mrb[0].mxu0
  %632 = vdwg.mxu0
  %v633 = vsub.f32 0.0, %v628
  %v634 = vmul.f32 %v633, 1.442695
  %v635 = vpow.pop %v634
  %v636 = vadd.f32 %v635, 1.0
  %v637 = vrcp.pop %v636
  %v638 = vmul.f32 %v628, %v637
  %v639 = vld [vmem:[%s2 + $0x3c] sm:$0x3]
  %v640 = vld [vmem:[%s3 + $0x78] sm:$0xf]
  %v641 = vpack.c.bf16 %v638, %v638
  %643 = vset.pattern.permute.xlu0 0
  %644 = vperm.xlu0 %643, %v640
  %v645 = vpop.permute.xlu0 %644
  %v648 = vsel %vm290, %v639, 0
  %v651 = vsel %vm54, %v641, 0
  %653 = vmatprep.subr.bf16.mxu0 0
  %654 = vmatpush1.bf16.msra.mxu0 %v651
  %655 = vmatprep.subr.bf16.mxu0 0
  %656 = vmatpush1.bf16.msra.mxu0 0
  %657 = vmatprep.subr.bf16.mxu0 0
  %658 = vmatpush1.bf16.msra.mxu0 0
  %659 = vmatprep.subr.bf16.mxu0 0
  %660 = vmatpush1.bf16.msra.mxu0 0
  %661 = vmatprep.subr.bf16.mxu0 0
  %662 = vmatpush1.bf16.msra.mxu0 0
  %663 = vmatprep.subr.bf16.mxu0 0
  %664 = vmatpush1.bf16.msra.mxu0 0
  %665 = vmatprep.subr.bf16.mxu0 0
  %666 = vmatpush1.bf16.msra.mxu0 0
  %667 = vmatprep.subr.bf16.mxu0 0
  %668 = vmatpush1.bf16.msra.mxu0 0
  %669 = vmatprep.subr.bf16.mxu0 0
  %670 = vmatpush1.bf16.msra.mxu0 0
  %671 = vmatprep.subr.bf16.mxu0 0
  %672 = vmatpush1.bf16.msra.mxu0 0
  %673 = vmatprep.subr.bf16.mxu0 0
  %674 = vmatpush1.bf16.msra.mxu0 0
  %675 = vmatprep.subr.bf16.mxu0 0
  %676 = vmatpush1.bf16.msra.mxu0 0
  %677 = vmatprep.subr.bf16.mxu0 0
  %678 = vmatpush1.bf16.msra.mxu0 0
  %679 = vmatprep.subr.bf16.mxu0 0
  %680 = vmatpush1.bf16.msra.mxu0 0
  %681 = vmatprep.subr.bf16.mxu0 0
  %682 = vmatpush1.bf16.msra.mxu0 0
  %683 = vmatprep.subr.bf16.mxu0 0
  %684 = vmatpush1.bf16.msra.mxu0 0
  %685 = vmatprep.mubr.bf16.mxu0 0
  %686 = vmatmul.mubr.bf16.gmra.mrb[0].mxu0 %v648
  %v687 = vpop.f32.mrb[0].mxu0
  %v688 = vadd.f32 %v645, %v687
  %v689 = vpop.f32.mrb[0].mxu0
  %v690 = vpop.f32.mrb[0].mxu0
  %v691 = vpop.f32.mrb[0].mxu0
  %692 = vdwg.mxu0
  %693 = vst [vmem:[%s4] sm:$0xf] %v688
  // Predicated region
  $region18: #{controlnet_forward.3} parent=0 // pred_check
    _
  $region19: #{controlnet_forward.3} parent=0 // pred_check_branch
    %695 = sbr.rel (0) target = $region21
  $region20: #{controlnet_forward.3} parent=0 // pred_region
    _
  $region21: #{controlnet_forward.3} parent=0 // pred_fallthru
    _
  // Predicated region
  $region22: #{controlnet_forward.3} parent=0 // pred_check
    _
  $region23: #{controlnet_forward.3} parent=0 // pred_check_branch
    %697 = sbr.rel (0) target = $region25
  $region24: #{controlnet_forward.3} parent=0 // pred_region
    _
  $region25: #{controlnet_forward.3} parent=0 // pred_fallthru
    _

</llo_original>
